<compile_context>
chip_gen: v6e
topology: v6e:2x2x1
jax: 0.10.0
libtpu: 0.0.40
codegen_flags: <defaults>
</compile_context>

<pallas_src>
import functools

import jax
import jax.numpy as jnp
from jax import lax
from jax.experimental import pallas as pl
from jax.experimental.pallas import tpu as pltpu


def _round_up(x: int, m: int) -> int:
    return (x + m - 1) // m * m


def _linear_kernel(x_ref, w_ref, b_ref, o_ref, acc_ref):
    # x_ref: (tm, tk)  w_ref: (tn, tk)  b_ref: (1, tn) f32
    # o_ref: (tm, tn)  acc_ref: (tm, tn) f32 scratch, resident across K axis.
    k = pl.program_id(2)

    @pl.when(k == 0)
    def _():
        acc_ref[...] = jnp.zeros_like(acc_ref)

    # Contract dim 1 (K) of x with dim 1 (K) of the (N, K) weight tile — the
    # MXU handles the transposed-RHS contraction natively, no transpose op.
    acc_ref[...] += lax.dot_general(
        x_ref[...], w_ref[...],
        dimension_numbers=(((1,), (1,)), ((), ())),
        preferred_element_type=jnp.float32,
    )

    @pl.when(k == pl.num_programs(2) - 1)
    def _():
        # Bias add exactly once, in f32, then a single cast (v5e-safe epilogue).
        o_ref[...] = (acc_ref[...] + b_ref[...]).astype(o_ref.dtype)


@functools.partial(jax.jit, static_argnames=("compute_dtype",))
def linear_multi_forward(x, weight, bias, *, compute_dtype=jnp.bfloat16):
    """Pallas equivalent of LinearMulti.forward.

    x:      (B, ...)                 — flattened per-sample (nn.Flatten)
    weight: (output_size, input_size) — nn.Linear.weight layout, NOT transposed
    bias:   (output_size,)
    returns (B, 1, output_size) in x's dtype.
    """
    B = x.shape[0]
    x_flat = x.reshape(B, -1)                       # nn.Flatten()
    K = x_flat.shape[1]
    N, Kw = weight.shape
    assert Kw == K, "input_size mismatch"
    out_dtype = x_flat.dtype

    # ---- tile sizes (sublane=8 / lane=128 aligned, VMEM-safe on v5e/v6e/v7x) ----
    Bp = _round_up(B, 8)
    tm = min(Bp, 256)                 # don't tile a tiny batch (GEMV-style)
    Bp = _round_up(Bp, tm)
    Np = _round_up(N, 128)            # lane-dense output stores
    tn = min(Np, 256)
    Np = _round_up(Np, tn)
    Kp = _round_up(K, 128)
    tk = min(Kp, 512)
    Kp = _round_up(Kp, tk)
    grid = (Bp // tm, Np // tn, Kp // tk)

    # ---- zero-padded, compute-dtype operands (zeros contribute nothing) ----
    x_p = jnp.pad(x_flat.astype(compute_dtype), ((0, Bp - B), (0, Kp - K)))
    w_p = jnp.pad(weight.astype(compute_dtype), ((0, Np - N), (0, Kp - K)))
    b_p = jnp.pad(bias.astype(jnp.float32), (0, Np - N)).reshape(1, Np)

    # ---- explicit VMEM budget with headroom (fits v7x's 64 MiB physical) ----
    csz = jnp.dtype(compute_dtype).itemsize
    osz = jnp.dtype(out_dtype).itemsize
    vmem_need = (2 * (tm * tk + tn * tk) * csz     # double-buffered x / w tiles
                 + 2 * tm * tn * osz               # double-buffered output tile
                 + 2 * tn * 4                      # bias tile
                 + tm * tn * 4)                    # f32 accumulator scratch
    vmem_limit = min(max(2 * vmem_need, 16 << 20), 32 << 20)

    out = pl.pallas_call(
        _linear_kernel,
        out_shape=jax.ShapeDtypeStruct((Bp, Np), out_dtype),
        grid_spec=pltpu.PrefetchScalarGridSpec(
            num_scalar_prefetch=0,
            grid=grid,
            in_specs=[
                pl.BlockSpec((tm, tk), lambda i, j, k: (i, k)),   # x tile
                pl.BlockSpec((tn, tk), lambda i, j, k: (j, k)),   # weight tile (N,K)
                pl.BlockSpec((1, tn), lambda i, j, k: (0, j)),    # bias tile
            ],
            out_specs=pl.BlockSpec((tm, tn), lambda i, j, k: (i, j)),
            scratch_shapes=[pltpu.VMEM((tm, tn), jnp.float32)],
        ),
        compiler_params=pltpu.CompilerParams(
            dimension_semantics=("parallel", "parallel", "arbitrary"),
            vmem_limit_bytes=vmem_limit,
        ),
        # On v5e/v6e a deeper weight pipeline (pipeline_mode=pl.Buffered(3) on
        # the weight spec) can help for very large K*N; default 2-deep is kept
        # here to stay within v7x's smaller VMEM.
    )(x_p, w_p, b_p)

    out = out[:B, :N]                               # strip padding
    return out[:, None, :]                          # torch.unsqueeze(out, 1)


if __name__ == "__main__":
    key = jax.random.PRNGKey(0)
    kx, kw, kb = jax.random.split(key, 3)

    # Small shapes consistent with the module: x = (batch, channels, seq)
    B, C, L = 2, 4, 16
    input_size = C * L        # 64
    output_size = 32

    x = jax.random.normal(kx, (B, C, L), dtype=jnp.float32)

    # Deterministic nn.Linear-style init: U(-1/sqrt(in), 1/sqrt(in))
    bound = 1.0 / jnp.sqrt(jnp.float32(input_size))
    weight = jax.random.uniform(
        kw, (output_size, input_size), dtype=jnp.float32,
        minval=-bound, maxval=bound)
    bias = jax.random.uniform(
        kb, (output_size,), dtype=jnp.float32, minval=-bound, maxval=bound)

    # Reference (same math as the PyTorch module), in f32.
    ref = (x.reshape(B, -1) @ weight.T + bias)[:, None, :]

    # Exact-semantics f32 path.
    out_f32 = jax.block_until_ready(
        linear_multi_forward(x, weight, bias, compute_dtype=jnp.float32))
    assert out_f32.shape == (B, 1, output_size), out_f32.shape
    assert jnp.allclose(out_f32, ref, atol=1e-5, rtol=1e-5)

    # Recommended bf16-MXU path (f32 accumulation + f32 bias add).
    out_bf16 = jax.block_until_ready(linear_multi_forward(x, weight, bias))
    assert out_bf16.shape == (B, 1, output_size), out_bf16.shape
    assert jnp.allclose(out_bf16, ref, atol=3e-2, rtol=3e-2)

    print("KERNEL_OK")
</pallas_src>

<mosaic_0001>
module attributes {stable_mosaic.version = 11 : i64} {
  func.func @_linear_kernel(%arg0: i32, %arg1: i32, %arg2: i32, %arg3: memref<8x128xf32, #tpu.memory_space<vmem>>, %arg4: memref<128x128xf32, #tpu.memory_space<vmem>>, %arg5: memref<1x128xf32, #tpu.memory_space<vmem>>, %arg6: memref<8x128xf32, #tpu.memory_space<vmem>>, %arg7: memref<8x128xf32, #tpu.memory_space<vmem>>) attributes {dimension_semantics = [#tpu.dimension_semantics<parallel>, #tpu.dimension_semantics<parallel>, #tpu.dimension_semantics<arbitrary>], iteration_bounds = array<i64: 1, 1, 1>, scalar_prefetch = 0 : i64, scratch_operands = 1 : i64, tpu.core_type = #tpu.core_type<tc>, window_params = [{transform_indices = @transform_0, window_bounds = array<i64: 8, 128>}, {transform_indices = @transform_1, window_bounds = array<i64: 128, 128>}, {transform_indices = @transform_2, window_bounds = array<i64: 1, 128>}, {transform_indices = @transform_3, window_bounds = array<i64: 8, 128>}]} {
    %c0_i32 = arith.constant 0 : i32
    %0 = arith.cmpi eq, %arg2, %c0_i32 : i32
    %1 = arith.extui %0 : i1 to i32
    %c0_i32_0 = arith.constant 0 : i32
    %2 = arith.cmpi ne, %1, %c0_i32_0 : i32
    scf.if %2 {
      %cst_10 = arith.constant 0.000000e+00 : f32
      %12 = vector.broadcast %cst_10 : f32 to vector<8x128xf32>
      %c0_11 = arith.constant 0 : index
      %c0_12 = arith.constant 0 : index
      %13 = vector.load %arg7[%c0_11, %c0_12] : memref<8x128xf32, #tpu.memory_space<vmem>>, vector<8x128xf32>
      tpu.vector_store %arg7[%c0_11, %c0_12], %12 {strides = array<i32>} : memref<8x128xf32, #tpu.memory_space<vmem>>, vector<8x128xf32>,
    } else {
    }
    %c0 = arith.constant 0 : index
    %c0_1 = arith.constant 0 : index
    %3 = vector.load %arg7[%c0, %c0_1] : memref<8x128xf32, #tpu.memory_space<vmem>>, vector<8x128xf32>
    %c0_2 = arith.constant 0 : index
    %c0_3 = arith.constant 0 : index
    %4 = vector.load %arg3[%c0_2, %c0_3] : memref<8x128xf32, #tpu.memory_space<vmem>>, vector<8x128xf32>
    %c0_4 = arith.constant 0 : index
    %c0_5 = arith.constant 0 : index
    %5 = vector.load %arg4[%c0_4, %c0_5] : memref<128x128xf32, #tpu.memory_space<vmem>>, vector<128x128xf32>
    %cst = arith.constant dense<0.000000e+00> : vector<8x128xf32>
    %6 = tpu.matmul %4, %5, %cst {dimension_numbers = #tpu.dot_dimension_numbers<[1], [1], [0], [0], [0, 0, 1, 0], [], []>} : vector<8x128xf32>, vector<128x128xf32>, vector<8x128xf32> -> vector<8x128xf32>
    %7 = arith.addf %3, %6 : vector<8x128xf32>
    %c0_6 = arith.constant 0 : index
    %c0_7 = arith.constant 0 : index
    %8 = vector.load %arg7[%c0_6, %c0_7] : memref<8x128xf32, #tpu.memory_space<vmem>>, vector<8x128xf32>
    tpu.vector_store %arg7[%c0_6, %c0_7], %7 {strides = array<i32>} : memref<8x128xf32, #tpu.memory_space<vmem>>, vector<8x128xf32>,
    %c0_i32_8 = arith.constant 0 : i32
    %9 = arith.cmpi eq, %arg2, %c0_i32_8 : i32
    %10 = arith.extui %9 : i1 to i32
    %c0_i32_9 = arith.constant 0 : i32
    %11 = arith.cmpi ne, %10, %c0_i32_9 : i32
    scf.if %11 {
      %c0_10 = arith.constant 0 : index
      %c0_11 = arith.constant 0 : index
      %12 = vector.load %arg7[%c0_10, %c0_11] : memref<8x128xf32, #tpu.memory_space<vmem>>, vector<8x128xf32>
      %c0_12 = arith.constant 0 : index
      %c0_13 = arith.constant 0 : index
      %13 = vector.load %arg5[%c0_12, %c0_13] : memref<1x128xf32, #tpu.memory_space<vmem>>, vector<1x128xf32>
      %14 = vector.broadcast %13 : vector<1x128xf32> to vector<8x128xf32>
      %15 = arith.addf %12, %14 : vector<8x128xf32>
      %c0_14 = arith.constant 0 : index
      %c0_15 = arith.constant 0 : index
      %16 = vector.load %arg6[%c0_14, %c0_15] : memref<8x128xf32, #tpu.memory_space<vmem>>, vector<8x128xf32>
      tpu.vector_store %arg6[%c0_14, %c0_15], %15 {strides = array<i32>} : memref<8x128xf32, #tpu.memory_space<vmem>>, vector<8x128xf32>,
    } else {
    }
    return
  }
  func.func @transform_0(%arg0: i32, %arg1: i32, %arg2: i32) -> (i32, i32) {
    %c0_i32 = arith.constant 0 : i32
    return %arg0, %arg2 : i32, i32
  }
  func.func @transform_1(%arg0: i32, %arg1: i32, %arg2: i32) -> (i32, i32) {
    %c0_i32 = arith.constant 0 : i32
    return %arg1, %arg2 : i32, i32
  }
  func.func @transform_2(%arg0: i32, %arg1: i32, %arg2: i32) -> (i32, i32) {
    %c0_i32 = arith.constant 0 : i32
    %c0_i32_0 = arith.constant 0 : i32
    return %c0_i32, %arg1 : i32, i32
  }
  func.func @transform_3(%arg0: i32, %arg1: i32, %arg2: i32) -> (i32, i32) {
    %c0_i32 = arith.constant 0 : i32
    return %arg0, %arg1 : i32, i32
  }
}

</mosaic_0001>

<llo_original>
// kernel: linear_multi_forward.1
$region0: #{linear_multi_forward.1}
  #allocation0 [shape = 'u32[]', space=smem, size = 0x4, offset = 0x4, fixed_abs, tag = 'smem constant byte address 0x4 - core index']
  #allocation1 [shape = 'u32[144,128]{1,0:T(1,128)}', space=vmem, size = 0x12000, scoped, tag = 'internal scratch']
  #allocation2 [shape = 'f32[8,128]{1,0:T(8,128)}', space=vmem, size = 0x1000, scoped, tag = 'scratch operand']
  %s0 = inlined_call_operand.vmem [shape: f32[8,128], index: 0, kind: input, shape index: {}]
  %s1 = inlined_call_operand.vmem [shape: f32[128,128], index: 1, kind: input, shape index: {}]
  %s2 = inlined_call_operand.vmem [shape: f32[1,128], index: 2, kind: input, shape index: {}]
  %s3 = inlined_call_operand.vmem [shape: f32[8,128], index: 3, kind: output, shape index: {}]
  %s4 = sld [smem:[#allocation0]]
  $region30: #{linear_multi_forward.1} parent=0
    _
  %s6 = ssub.s32 1, %s4
  %s7 = scalar_select 0, %s6, %s4
  // Predicated region
  $region2: #{linear_multi_forward.1} parent=0 // pred_check
    _
  $region3: #{linear_multi_forward.1} parent=0 // pred_check_branch
    %9 = sbr.rel (0) target = $region5
  $region4: #{linear_multi_forward.1} parent=0 // pred_region
    _
  $region5: #{linear_multi_forward.1} parent=0 // pred_fallthru
    _
  // Predicated region
  $region6: #{linear_multi_forward.1} parent=0 // pred_check
    _
  $region7: #{linear_multi_forward.1} parent=0 // pred_check_branch
    %11 = sbr.rel (0) target = $region9
  $region8: #{linear_multi_forward.1} parent=0 // pred_region
    _
  $region9: #{linear_multi_forward.1} parent=0 // pred_fallthru
    _
  // Predicated region
  $region10: #{linear_multi_forward.1} parent=0 // pred_check
    _
  $region11: #{linear_multi_forward.1} parent=0 // pred_check_branch
    %13 = sbr.rel (0) target = $region13
  $region12: #{linear_multi_forward.1} parent=0 // pred_region
    _
  $region13: #{linear_multi_forward.1} parent=0 // pred_fallthru
    _
  %p14 = scmp.eq.s32.totalorder 0, 0
  // Predicated region
  $region14: #{linear_multi_forward.1} parent=0 // pred_check
    %p15 = pneg %p14
  $region15: #{linear_multi_forward.1} parent=0 // pred_check_branch
    %17 = sbr.rel (%p15) target = $region17
  $region16: #{linear_multi_forward.1} parent=0 // pred_region
    %18 = vst [vmem:[#allocation2] sm:$0xff] 0.0
  $region17: #{linear_multi_forward.1} parent=0 // pred_fallthru
    _
  %v19 = vld [vmem:[#allocation2] sm:$0xff]
  %v20 = vld [vmem:[%s0] sm:$0xff]
  %v21 = vld [vmem:[%s1] sm:$0xff]
  %v22 = vld [vmem:[%s1 + $0x8] sm:$0xff]
  %v23 = vld [vmem:[%s1 + $0x10] sm:$0xff]
  %v24 = vld [vmem:[%s1 + $0x18] sm:$0xff]
  %v25 = vld [vmem:[%s1 + $0x20] sm:$0xff]
  %v26 = vld [vmem:[%s1 + $0x28] sm:$0xff]
  %v27 = vld [vmem:[%s1 + $0x30] sm:$0xff]
  %v28 = vld [vmem:[%s1 + $0x38] sm:$0xff]
  %v29 = vld [vmem:[%s1 + $0x40] sm:$0xff]
  %v30 = vld [vmem:[%s1 + $0x48] sm:$0xff]
  %v31 = vld [vmem:[%s1 + $0x50] sm:$0xff]
  %v32 = vld [vmem:[%s1 + $0x58] sm:$0xff]
  %v33 = vld [vmem:[%s1 + $0x60] sm:$0xff]
  %v34 = vld [vmem:[%s1 + $0x68] sm:$0xff]
  %v35 = vld [vmem:[%s1 + $0x70] sm:$0xff]
  %v36 = vld [vmem:[%s1 + $0x78] sm:$0xff]
  %37 = vmatprep.subr.mxu0 0.0
  %38 = vmatpush1.xpose.msra.mxu0 %v36
  %39 = vmatprep.subr.mxu0 0.0
  %40 = vmatpush1.xpose.msra.mxu0 %v35
  %41 = vmatprep.subr.mxu0 0.0
  %42 = vmatpush1.xpose.msra.mxu0 %v34
  %43 = vmatprep.subr.mxu0 0.0
  %44 = vmatpush1.xpose.msra.mxu0 %v33
  %45 = vmatprep.subr.mxu0 0.0
  %46 = vmatpush1.xpose.msra.mxu0 %v32
  %47 = vmatprep.subr.mxu0 0.0
  %48 = vmatpush1.xpose.msra.mxu0 %v31
  %49 = vmatprep.subr.mxu0 0.0
  %50 = vmatpush1.xpose.msra.mxu0 %v30
  %51 = vmatprep.subr.mxu0 0.0
  %52 = vmatpush1.xpose.msra.mxu0 %v29
  %53 = vmatprep.subr.mxu0 0.0
  %54 = vmatpush1.xpose.msra.mxu0 %v28
  %55 = vmatprep.subr.mxu0 0.0
  %56 = vmatpush1.xpose.msra.mxu0 %v27
  %57 = vmatprep.subr.mxu0 0.0
  %58 = vmatpush1.xpose.msra.mxu0 %v26
  %59 = vmatprep.subr.mxu0 0.0
  %60 = vmatpush1.xpose.msra.mxu0 %v25
  %61 = vmatprep.subr.mxu0 0.0
  %62 = vmatpush1.xpose.msra.mxu0 %v24
  %63 = vmatprep.subr.mxu0 0.0
  %64 = vmatpush1.xpose.msra.mxu0 %v23
  %65 = vmatprep.subr.mxu0 0.0
  %66 = vmatpush1.xpose.msra.mxu0 %v22
  %67 = vmatprep.subr.mxu0 0.0
  %68 = vmatpush1.xpose.msra.mxu0 %v21
  %69 = vmatprep.subr.mxu0 0.0
  %70 = vmatpush2.xpose.msra.mxu0 0.0
  %71 = vmatprep.subr.mxu0 0.0
  %72 = vmatpush2.xpose.msra.mxu0 0.0
  %73 = vmatprep.subr.mxu0 0.0
  %74 = vmatpush2.xpose.msra.mxu0 0.0
  %75 = vmatprep.subr.mxu0 0.0
  %76 = vmatpush2.xpose.msra.mxu0 0.0
  %77 = vmatprep.subr.mxu0 0.0
  %78 = vmatpush2.xpose.msra.mxu0 0.0
  %79 = vmatprep.subr.mxu0 0.0
  %80 = vmatpush2.xpose.msra.mxu0 0.0
  %81 = vmatprep.subr.mxu0 0.0
  %82 = vmatpush2.xpose.msra.mxu0 0.0
  %83 = vmatprep.subr.mxu0 0.0
  %84 = vmatpush2.xpose.msra.mxu0 0.0
  %85 = vmatprep.subr.mxu0 0.0
  %86 = vmatpush2.xpose.msra.mxu0 0.0
  %87 = vmatprep.subr.mxu0 0.0
  %88 = vmatpush2.xpose.msra.mxu0 0.0
  %89 = vmatprep.subr.mxu0 0.0
  %90 = vmatpush2.xpose.msra.mxu0 0.0
  %91 = vmatprep.subr.mxu0 0.0
  %92 = vmatpush2.xpose.msra.mxu0 0.0
  %93 = vmatprep.subr.mxu0 0.0
  %94 = vmatpush2.xpose.msra.mxu0 0.0
  %95 = vmatprep.subr.mxu0 0.0
  %96 = vmatpush2.xpose.msra.mxu0 0.0
  %97 = vmatprep.subr.mxu0 0.0
  %98 = vmatpush2.xpose.msra.mxu0 0.0
  %99 = vmatprep.subr.mxu0 0.0
  %100 = vmatpush2.xpose.msra.mxu0 0.0
  %101 = vmatprep.mubr.f32.mxu0 0.0
  %102 = vmatmul.mubr.f32.gmra.mxu0 %v20
  %v103 = vpop.f32.mrf.mxu0
  %v104 = vadd.f32 0.0, %v103
  %v105 = vpop.f32.mrf.mxu0
  %106 = vdwg.mxu0
  %v107 = vadd.f32 %v19, %v104
  %108 = vst [vmem:[#allocation2] sm:$0xff] %v107
  // Predicated region
  $region18: #{linear_multi_forward.1} parent=0 // pred_check
    %p109 = pneg %p14
  $region19: #{linear_multi_forward.1} parent=0 // pred_check_branch
    %111 = sbr.rel (%p109) target = $region21
  $region20: #{linear_multi_forward.1} parent=0 // pred_region
    %v112 = vld [vmem:[#allocation2] sm:$0xff]
    %v113 = vld [vmem:[%s2] sm:$0x1]
    %v115 = vlaneseq
    %v116 = vshrl.u32 %v115, 7
    %v117 = vsub.s32 0, %v116
    %v118 = vrot.slane %v113, %v117
    %v120 = vadd.f32 %v112, %v118
    %121 = vst [vmem:[%s3] sm:$0xff] %v120
  $region21: #{linear_multi_forward.1} parent=0 // pred_fallthru
    _
  // Predicated region
  $region22: #{linear_multi_forward.1} parent=0 // pred_check
    _
  $region23: #{linear_multi_forward.1} parent=0 // pred_check_branch
    %123 = sbr.rel (0) target = $region25
  $region24: #{linear_multi_forward.1} parent=0 // pred_region
    _
  $region25: #{linear_multi_forward.1} parent=0 // pred_fallthru
    _
  // Predicated region
  $region26: #{linear_multi_forward.1} parent=0 // pred_check
    _
  $region27: #{linear_multi_forward.1} parent=0 // pred_check_branch
    %125 = sbr.rel (0) target = $region29
  $region28: #{linear_multi_forward.1} parent=0 // pred_region
    _
  $region29: #{linear_multi_forward.1} parent=0 // pred_fallthru
    _

</llo_original>
